<compile_context>
chip_gen: v7x
topology: tpu7x:2x2x1
jax: 0.10.0
libtpu: 0.0.40
codegen_flags: <defaults>
</compile_context>

<pallas_src>
import functools

import jax
import jax.numpy as jnp
from jax.experimental import pallas as pl
from jax.experimental.pallas import tpu as pltpu


# ----------------------------- Pallas kernel --------------------------------
def affine_kernel(x_ref, w_ref, b_ref, o_ref):
    # x_ref: (tb, D) f32, w_ref: (1, D) f32, b_ref: (1, 1) f32, o_ref: (1, tb) f32
    prod = x_ref[...] * w_ref[...]            # VPU broadcast multiply over rows
    row = jnp.sum(prod, axis=-1)              # XLU cross-lane reduce -> (tb,)
    o_ref[...] = row[None, :] + b_ref[...]    # lane-dense (1, tb) store


# ------------------------------ wrapper --------------------------------------
def _round_up(x, m):
    return ((x + m - 1) // m) * m


@functools.partial(jax.jit, static_argnames=("tb_max",))
def mlp_forward(x, w_eff_row, b_eff, tb_max=1024):
    """x: (B, D) f32, w_eff_row: (1, D) f32, b_eff: (1, 1) f32 -> (B, 1) f32."""
    x = x.astype(jnp.float32)
    B, D = x.shape

    if B <= 256:
        # Single tile sized exactly to the batch: no padded-row work at all.
        tb = B
    else:
        # >= 2 grid steps so v7x's 2 TensorCores both get work ("parallel" axis);
        # tile is a multiple of 128 for unmasked lane-dense output stores.
        tb = min(tb_max, _round_up(pl.cdiv(B, 2), 128))
        # Keep the double-buffered x tile comfortably inside VMEM (v7x: 64 MiB/TC).
        while tb > 128 and tb * D * 4 > 8 * 1024 * 1024:
            tb //= 2
    n_tiles = pl.cdiv(B, tb)

    out = pl.pallas_call(
        affine_kernel,
        out_shape=jax.ShapeDtypeStruct((1, B), jnp.float32),
        grid=(n_tiles,),
        in_specs=[
            pl.BlockSpec((tb, D), lambda i: (i, 0)),   # x streamed over batch
            pl.BlockSpec((1, D), lambda i: (0, 0)),    # folded weight row, resident
            pl.BlockSpec((1, 1), lambda i: (0, 0)),    # folded bias, resident
        ],
        out_specs=pl.BlockSpec((1, tb), lambda i: (0, i)),   # lane-dense output row
        compiler_params=pltpu.CompilerParams(
            dimension_semantics=("parallel",),
            vmem_limit_bytes=48 * 1024 * 1024,
        ),
    )(x, w_eff_row, b_eff)

    return out.reshape(B, 1)


# ----------------------- param prep (done once, not per-call) ----------------
def fold_params(params):
    """Collapse the purely-affine eval-mode stack into (1, D) weights + (1, 1) bias."""
    hi = jax.lax.Precision.HIGHEST
    w1, w2, w3, w4 = params["w1"], params["w2"], params["w3"], params["w4"]
    b1, b2, b3, b4 = params["b1"], params["b2"], params["b3"], params["b4"]
    w_eff = jnp.dot(jnp.dot(jnp.dot(w1, w2, precision=hi), w3, precision=hi),
                    w4, precision=hi)                                   # (D, 1)
    b_eff = jnp.dot(
        jnp.dot(jnp.dot(b1, w2, precision=hi) + b2, w3, precision=hi) + b3,
        w4, precision=hi) + b4                                          # (1, 1)
    return w_eff.reshape(1, -1).astype(jnp.float32), b_eff.reshape(1, 1).astype(jnp.float32)


# ----------------------- deterministic param init ----------------------------
def init_linear(key, fan_in, fan_out):
    """Mimic PyTorch nn.Linear default init: U(-1/sqrt(fan_in), 1/sqrt(fan_in))."""
    kw, kb = jax.random.split(key)
    bound = 1.0 / jnp.sqrt(jnp.float32(fan_in))
    # Stored transposed relative to PyTorch: (in, out) so forward is x @ W.
    w = jax.random.uniform(kw, (fan_in, fan_out), jnp.float32, -bound, bound)
    b = jax.random.uniform(kb, (1, fan_out), jnp.float32, -bound, bound)
    return w, b


def make_params(key, input_size):
    k1, k2, k3, k4 = jax.random.split(key, 4)
    w1, b1 = init_linear(k1, input_size, 1536)
    w2, b2 = init_linear(k2, 1536, 384)
    w3, b3 = init_linear(k3, 384, 64)
    w4, b4 = init_linear(k4, 64, 1)
    return dict(w1=w1, b1=b1, w2=w2, b2=b2, w3=w3, b3=b3, w4=w4, b4=b4)


def mlp_reference(x, p):
    """Plain-JAX per-layer f32 reference (dropout = identity in eval mode)."""
    hi = jax.lax.Precision.HIGHEST
    h = jnp.dot(x, p["w1"], precision=hi) + p["b1"]
    h = jnp.dot(h, p["w2"], precision=hi) + p["b2"]
    h = jnp.dot(h, p["w3"], precision=hi) + p["b3"]
    return jnp.dot(h, p["w4"], precision=hi) + p["b4"]


# --------------------------------- main ---------------------------------------
if __name__ == "__main__":
    key = jax.random.PRNGKey(0)
    kx, kp, kx2, kx3 = jax.random.split(key, 4)

    input_size = 32          # MLP(input_size=32)
    params = make_params(kp, input_size)
    w_eff_row, b_eff = fold_params(params)

    # Small case: batch=8 -> single exact (8, D) tile, no padded rows.
    x = jax.random.normal(kx, (8, input_size), jnp.float32)
    out = jax.block_until_ready(mlp_forward(x, w_eff_row, b_eff))
    ref = mlp_reference(x, params)
    assert out.shape == (8, 1)
    assert jnp.allclose(out, ref, atol=1e-3, rtol=1e-3), "mismatch vs reference (small)"

    # Mid case: batch=200 -> single (200, D) tile clamped to the batch.
    x2 = jax.random.normal(kx2, (200, input_size), jnp.float32)
    out2 = jax.block_until_ready(mlp_forward(x2, w_eff_row, b_eff))
    ref2 = mlp_reference(x2, params)
    assert out2.shape == (200, 1)
    assert jnp.allclose(out2, ref2, atol=1e-3, rtol=1e-3), "mismatch vs reference (mid)"

    # Multi-tile case: batch=520 -> 2 grid steps (tb=384), partial tail tile
    # exercises the masked out-of-bounds read/write path (no wrapper jnp.pad).
    x3 = jax.random.normal(kx3, (520, input_size), jnp.float32)
    out3 = jax.block_until_ready(mlp_forward(x3, w_eff_row, b_eff))
    ref3 = mlp_reference(x3, params)
    assert out3.shape == (520, 1)
    assert jnp.allclose(out3, ref3, atol=1e-3, rtol=1e-3), "mismatch vs reference (multi-tile)"

    print("KERNEL_OK")
</pallas_src>

<mosaic_0001>
module attributes {stable_mosaic.version = 11 : i64} {
  func.func @affine_kernel(%arg0: i32, %arg1: memref<8x32xf32, #tpu.memory_space<vmem>>, %arg2: memref<1x32xf32, #tpu.memory_space<vmem>>, %arg3: memref<1x1xf32, #tpu.memory_space<vmem>>, %arg4: memref<1x8xf32, #tpu.memory_space<vmem>>) attributes {dimension_semantics = [#tpu.dimension_semantics<parallel>], iteration_bounds = array<i64: 1>, scalar_prefetch = 0 : i64, scratch_operands = 0 : i64, tpu.core_type = #tpu.core_type<tc>, window_params = [{transform_indices = @transform_0, window_bounds = array<i64: 8, 32>}, {pipeline_mode = #tpu.pipeline_mode<synchronous>, transform_indices = @transform_1, window_bounds = array<i64: 1, 32>}, {pipeline_mode = #tpu.pipeline_mode<synchronous>, transform_indices = @transform_2, window_bounds = array<i64: 1, 1>}, {transform_indices = @transform_3, window_bounds = array<i64: 1, 8>}]} {
    %c0 = arith.constant 0 : index
    %c0_0 = arith.constant 0 : index
    %0 = vector.load %arg1[%c0, %c0_0] : memref<8x32xf32, #tpu.memory_space<vmem>>, vector<8x32xf32>
    %c0_1 = arith.constant 0 : index
    %c0_2 = arith.constant 0 : index
    %1 = vector.load %arg2[%c0_1, %c0_2] : memref<1x32xf32, #tpu.memory_space<vmem>>, vector<1x32xf32>
    %2 = vector.broadcast %1 : vector<1x32xf32> to vector<8x32xf32>
    %3 = arith.mulf %0, %2 : vector<8x32xf32>
    %cst = arith.constant dense<0.000000e+00> : vector<8xf32>
    %4 = vector.multi_reduction <add>, %3, %cst [1] : vector<8x32xf32> to vector<8xf32>
    %5 = vector.shape_cast %4 : vector<8xf32> to vector<1x8xf32>
    %c0_3 = arith.constant 0 : index
    %c0_4 = arith.constant 0 : index
    %6 = vector.load %arg3[%c0_3, %c0_4] : memref<1x1xf32, #tpu.memory_space<vmem>>, vector<1x1xf32>
    %7 = vector.broadcast %6 : vector<1x1xf32> to vector<1x8xf32>
    %8 = arith.addf %5, %7 : vector<1x8xf32>
    %c0_5 = arith.constant 0 : index
    %c0_6 = arith.constant 0 : index
    %9 = vector.load %arg4[%c0_5, %c0_6] : memref<1x8xf32, #tpu.memory_space<vmem>>, vector<1x8xf32>
    tpu.vector_store %arg4[%c0_5, %c0_6], %8 {strides = array<i32>} : memref<1x8xf32, #tpu.memory_space<vmem>>, vector<1x8xf32>,
    return
  }
  func.func @transform_0(%arg0: i32) -> (i32, i32) {
    %c0_i32 = arith.constant 0 : i32
    %c0_i32_0 = arith.constant 0 : i32
    return %arg0, %c0_i32 : i32, i32
  }
  func.func @transform_1(%arg0: i32) -> (i32, i32) {
    %c0_i32 = arith.constant 0 : i32
    %c0_i32_0 = arith.constant 0 : i32
    %c0_i32_1 = arith.constant 0 : i32
    return %c0_i32, %c0_i32_0 : i32, i32
  }
  func.func @transform_2(%arg0: i32) -> (i32, i32) {
    %c0_i32 = arith.constant 0 : i32
    %c0_i32_0 = arith.constant 0 : i32
    %c0_i32_1 = arith.constant 0 : i32
    return %c0_i32, %c0_i32_0 : i32, i32
  }
  func.func @transform_3(%arg0: i32) -> (i32, i32) {
    %c0_i32 = arith.constant 0 : i32
    %c0_i32_0 = arith.constant 0 : i32
    return %c0_i32, %arg0 : i32, i32
  }
}

</mosaic_0001>

<llo_original>
// kernel: mlp_forward.1
$region0: #{mlp_forward.1}
  #allocation0 [shape = 'u32[]', space=smem, size = 0x4, offset = 0x4, fixed_abs, tag = 'smem constant byte address 0x4 - core index']
  #allocation1 [shape = 'u32[144,128]{1,0:T(1,128)}', space=vmem, size = 0x12000, scoped, tag = 'internal scratch']
  #allocation2 [shape = 'f32[1,1]{1,0:T(1,128)S(1)}', space=vmem, size = 0x200, scoped, tag = 'scoped memory for mlp_forward.1']
  %s0 = inlined_call_operand.hbm [shape: f32[8,32], index: 0, kind: input, shape index: {}]
  %s1 = inlined_call_operand.vmem [shape: f32[1,32], index: 1, kind: input, shape index: {}]
  %s2 = inlined_call_operand.<no memory space> [shape: f32[1,1], index: 2, kind: input, shape index: {}]
  %s3 = inlined_call_operand.hbm [shape: f32[1,8], index: 3, kind: output, shape index: {}]
  %s4 = sld [smem:[#allocation0]]
  $region26: #{mlp_forward.1} parent=0
    _
  %s6 = ssub.s32 1, %s4
  %s7 = scalar_select 0, %s6, %s4
  %v8 = vstv %s2
  %9 = vst [vmem:[#allocation2] sm:$0x1] %v8
  $region1: #{mlp_forward.1} parent=0
    #allocation3 [shape = 'u8[4096]{0}', space=vmem, size = 0x1000, scoped, tag = 'input window, operand 0, single buffered']
    #allocation4 [shape = 's32[1]{0}', space=sflag, size = 0x4, scoped, tag = 'scoped memory for mlp_forward.1']
    #allocation5 [shape = 's32[1]{0}', space=sflag, size = 0x4, scoped, tag = 'scoped memory for mlp_forward.1']
    #allocation6 [shape = 'u8[512]{0}', space=vmem, size = 0x400, scoped, tag = 'output window, operand 0, single buffered']
    %10 = vsyncpa [#allocation4], 0
    %11 = vsyncpa [#allocation5], 0
    // Predicated region
    $region2: #{mlp_forward.1} parent=1 // pred_check
      _
    $region3: #{mlp_forward.1} parent=1 // pred_check_branch
      %13 = sbr.rel (0) target = $region5
    $region4: #{mlp_forward.1} parent=1 // pred_region
      %s15 = ssub.s32 128, 128
      %16 = vsyncadd [#allocation4], %s15
      %s18 = sshll.u32 [#allocation3], 4
      %s19 = int_to_ptr.vmem [resolvable:$true] %s18
      %21 = dma.hbm_to_vmem [thread:$0]  %s0, 128, %s19, [#allocation4]
    $region5: #{mlp_forward.1} parent=1 // pred_fallthru
      _
    // Predicated region
    $region6: #{mlp_forward.1} parent=1 // pred_check
      _
    $region7: #{mlp_forward.1} parent=1 // pred_check_branch
      %23 = sbr.rel (0) target = $region9
    $region8: #{mlp_forward.1} parent=1 // pred_region
      _
    $region9: #{mlp_forward.1} parent=1 // pred_fallthru
      _
    // Predicated region
    $region10: #{mlp_forward.1} parent=1 // pred_check
      _
    $region11: #{mlp_forward.1} parent=1 // pred_check_branch
      %25 = sbr.rel (0) target = $region13
    $region12: #{mlp_forward.1} parent=1 // pred_region
      _
    $region13: #{mlp_forward.1} parent=1 // pred_fallthru
      _
    // Predicated region
    $region14: #{mlp_forward.1} parent=1 // pred_check
      _
    $region15: #{mlp_forward.1} parent=1 // pred_check_branch
      %27 = sbr.rel (0) target = $region17
    $region16: #{mlp_forward.1} parent=1 // pred_region
      %28 = dma.done [#allocation4], 128
    $region17: #{mlp_forward.1} parent=1 // pred_fallthru
      _
    %v29 = vld [vmem:[#allocation3] sm:$0xff]
    %v30 = vld [vmem:[%s1] sm:$0x1]
    %v32 = vlaneseq
    %v33 = vshrl.u32 %v32, 7
    %v34 = vsub.s32 0, %v33
    %v35 = vrot.slane %v30, %v34
    %v37 = vmul.f32 %v29, %v35
    %vm38 = vcmask 261120
    %v39 = vsel %vm38, %v37, 0.0
    %40 = vadd.xlane.f32.xlu0 %v39
    %v41 = vpop.xlane.xlu0 %40
    %v42 = vld [vmem:[#allocation2] sm:$0x1]
    %44 = vset.pattern.permute.xlu0 0
    %45 = vperm.xlu0 %44, %v42
    %v46 = vpop.permute.xlu0 %45
    %v48 = vlaneseq
    %v49 = vshrl.u32 %v48, 7
    %v50 = vsub.s32 0, %v49
    %v51 = vrot.slane %v46, %v50
    %v52 = vadd.f32 %v41, %v51
    %v54 = vlaneseq
    %v55 = vand.u32 %v54, 127
    %v56 = vlaneseq
    %v57 = vshrl.u32 %v56, 7
    %v58 = vsub.s32 %v55, %v57
    %v59 = vrot.slane %v52, %v58
    %vm61 = vcmask 57344
    %62 = vst.msk [vmem:[#allocation6] sm:$0x1] %vm61, %v59
    // Predicated region
    $region18: #{mlp_forward.1} parent=1 // pred_check
      _
    $region19: #{mlp_forward.1} parent=1 // pred_check_branch
      %64 = sbr.rel (0) target = $region21
    $region20: #{mlp_forward.1} parent=1 // pred_region
      %s66 = ssub.s32 16, 16
      %67 = vsyncadd [#allocation5], %s66
      %s69 = sshll.u32 [#allocation6], 4
      %s70 = int_to_ptr.vmem [resolvable:$true] %s69
      %72 = dma.vmem_to_hbm [thread:$0]  %s70, 16, %s3, [#allocation5]
    $region21: #{mlp_forward.1} parent=1 // pred_fallthru
      _
    // Predicated region
    $region22: #{mlp_forward.1} parent=1 // pred_check
      _
    $region23: #{mlp_forward.1} parent=1 // pred_check_branch
      %74 = sbr.rel (0) target = $region25
    $region24: #{mlp_forward.1} parent=1 // pred_region
      %75 = dma.done [#allocation5], 16
    $region25: #{mlp_forward.1} parent=1 // pred_fallthru
      _
    %76 = vsyncpa [#allocation4], 1
    %77 = vsyncpa [#allocation5], 1

</llo_original>
